<compile_context>
chip_gen: v6e
topology: v6e:2x2x1
jax: 0.10.0
libtpu: 0.0.40
codegen_flags: <defaults>
</compile_context>

<pallas_src>
import functools

import jax
import jax.numpy as jnp
from jax.experimental import pallas as pl
from jax.experimental.pallas import tpu as pltpu


_TARGET_BLOCK_BYTES = 2 << 20   # ~2 MiB memory tile -> ~8 MiB live VMEM double-buffered
                                # (fits v5e's 16 MiB scoped default and v7x's 64 MiB VMEM)


def _round_up(x, m):
    return ((x + m - 1) // m) * m


def _pick_block_batch(batch, d, itemsize):
    """Pick a batch tile of ~2 MiB, rounded to the sublane multiple for the dtype."""
    sublane = max(1, 32 // max(1, itemsize))      # 8 for f32, 16 for bf16, 32 for int8
    bb = _TARGET_BLOCK_BYTES // max(1, d * itemsize)
    bb = max(sublane, (bb // sublane) * sublane)
    bb = min(bb, _round_up(batch, sublane))
    return int(bb)


def _decay_attn_kernel(decay_factor, mem_ref, dt_ref, out_ref):
    # mem_ref: (tb, D) in memory's dtype; dt_ref: (tb, 1) f32; out_ref: (tb, D).
    score = jnp.exp(jnp.float32(-decay_factor) * dt_ref[...])        # (tb, 1), EUP exp
    # Broadcast multiply in the memory dtype (no f32 round-trip of the big tile).
    out_ref[...] = mem_ref[...] * score.astype(out_ref.dtype)


def decay_temporal_attention(memory, message_time, current_time, decay_factor=0.0,
                             *, block_batch=None, skip_identity_fast_path=True):
    """memory: [B, D] float; message_time/current_time: [B] (any numeric dtype)."""
    batch, d = memory.shape

    # decay_factor == 0.0 makes the op an identity on `memory`: score == exp(0) == 1.
    # Skipping the pallas_call removes a full HBM read+write of B*D elements.
    if (skip_identity_fast_path and isinstance(decay_factor, (int, float))
            and float(decay_factor) == 0.0):
        return memory

    # Single side input: delta_t = current_time - message_time, as an f32 [B, 1] column.
    delta_t = (current_time.reshape(batch, 1).astype(jnp.float32)
               - message_time.reshape(batch, 1).astype(jnp.float32))

    itemsize = jnp.dtype(memory.dtype).itemsize
    sublane = max(1, 32 // max(1, itemsize))
    if block_batch is None:
        block_batch = _pick_block_batch(batch, d, itemsize)
    else:
        block_batch = max(sublane, _round_up(int(block_batch), sublane))

    # Pad the batch so every block is full (unmasked stores, clean (8,128) tiling).
    batch_padded = _round_up(batch, block_batch)
    if batch_padded != batch:
        memory_in = jnp.pad(memory, ((0, batch_padded - batch), (0, 0)))
        delta_t = jnp.pad(delta_t, ((0, batch_padded - batch), (0, 0)))
    else:
        memory_in = memory

    grid = (batch_padded // block_batch,)
    kernel = functools.partial(_decay_attn_kernel, float(decay_factor))

    out = pl.pallas_call(
        kernel,
        out_shape=jax.ShapeDtypeStruct((batch_padded, d), memory.dtype),
        grid_spec=pltpu.PrefetchScalarGridSpec(
            num_scalar_prefetch=0,
            grid=grid,
            in_specs=[
                pl.BlockSpec((block_batch, d), lambda i: (i, 0)),
                pl.BlockSpec((block_batch, 1), lambda i: (i, 0)),
            ],
            out_specs=pl.BlockSpec((block_batch, d), lambda i: (i, 0)),
        ),
        compiler_params=pltpu.CompilerParams(
            dimension_semantics=("parallel",),   # megacore-shardable on v7x
            vmem_limit_bytes=32 << 20,           # safe on v5e/v6e/v7x for ~2 MiB tiles
        ),
    )(memory_in, delta_t)

    if batch_padded != batch:
        out = out[:batch]
    return out


class DecayTemporalAttentionJAX:
    """Mirror of the PyTorch module (decay_factor is forced to 0.0 as in __init__)."""

    def __init__(self, time_dim, method="sum", decay_factor=0.1):
        self.time_dim = time_dim
        self.method = method
        self.decay_factor = 0.0  # matches the reference module, which overrides it
        # Deterministic parameter init (ones), unused in forward, kept for parity.
        self.w = jnp.ones((time_dim,), dtype=jnp.float32)

    def __call__(self, memory, message_time, current_time):
        # method == 'sum' and the else-branch are identical in the reference.
        return decay_temporal_attention(memory, message_time, current_time,
                                        decay_factor=self.decay_factor)


if __name__ == "__main__":
    key = jax.random.PRNGKey(0)
    k_mem, k_mt, k_ct = jax.random.split(key, 3)

    batch_size = 500      # deliberately NOT a multiple of the tile -> exercises padding
    memory_dim = 128      # lane axis, multiple of 128
    time_dim = 32

    memory = jax.random.normal(k_mem, (batch_size, memory_dim), dtype=jnp.float32)
    message_time = jax.random.uniform(k_mt, (batch_size,), minval=0.0, maxval=100.0)
    current_time = message_time + jax.random.uniform(k_ct, (batch_size,),
                                                     minval=0.0, maxval=10.0)

    # 1) Module path: decay_factor == 0.0 -> identity fast path (no kernel launch).
    module = DecayTemporalAttentionJAX(time_dim=time_dim, method="sum")
    out0 = jax.block_until_ready(module(memory, message_time, current_time))
    assert out0.shape == (batch_size, memory_dim)
    assert jnp.allclose(out0, memory)

    # 2) Kernel path forced with decay_factor == 0.0: must still reproduce memory.
    out1 = jax.block_until_ready(decay_temporal_attention(
        memory, message_time, current_time, decay_factor=0.0,
        block_batch=128, skip_identity_fast_path=False))
    assert jnp.allclose(out1, memory, atol=1e-6, rtol=1e-6)

    # 3) Kernel path with non-zero decay and a multi-step pipelined grid (4 tiles of 128).
    decay = 0.05
    out2 = jax.block_until_ready(decay_temporal_attention(
        memory, message_time, current_time, decay_factor=decay, block_batch=128))
    delta_t = (current_time - message_time).astype(jnp.float32)
    ref = memory * jnp.exp(-decay * delta_t)[:, None]
    assert out2.shape == (batch_size, memory_dim)
    assert jnp.allclose(out2, ref, atol=1e-4, rtol=1e-4)

    print("KERNEL_OK")
</pallas_src>

<mosaic_0001>
module attributes {stable_mosaic.version = 11 : i64} {
  func.func @_decay_attn_kernel(%arg0: i32, %arg1: memref<128x128xf32, #tpu.memory_space<vmem>>, %arg2: memref<128x1xf32, #tpu.memory_space<vmem>>, %arg3: memref<128x128xf32, #tpu.memory_space<vmem>>) attributes {dimension_semantics = [#tpu.dimension_semantics<parallel>], iteration_bounds = array<i64: 4>, scalar_prefetch = 0 : i64, scratch_operands = 0 : i64, tpu.core_type = #tpu.core_type<tc>, window_params = [{transform_indices = @transform_0, window_bounds = array<i64: 128, 128>}, {transform_indices = @transform_1, window_bounds = array<i64: 128, 1>}, {transform_indices = @transform_2, window_bounds = array<i64: 128, 128>}]} {
    %c0 = arith.constant 0 : index
    %c0_0 = arith.constant 0 : index
    %0 = vector.load %arg2[%c0, %c0_0] : memref<128x1xf32, #tpu.memory_space<vmem>>, vector<128x1xf32>
    %cst = arith.constant -0.000000e+00 : f32
    %1 = vector.broadcast %cst : f32 to vector<128x1xf32>
    %2 = arith.mulf %1, %0 : vector<128x1xf32>
    %3 = math.exp %2 : vector<128x1xf32>
    %c0_1 = arith.constant 0 : index
    %c0_2 = arith.constant 0 : index
    %4 = vector.load %arg1[%c0_1, %c0_2] : memref<128x128xf32, #tpu.memory_space<vmem>>, vector<128x128xf32>
    %5 = vector.broadcast %3 : vector<128x1xf32> to vector<128x128xf32>
    %6 = arith.mulf %4, %5 : vector<128x128xf32>
    %c0_3 = arith.constant 0 : index
    %c0_4 = arith.constant 0 : index
    %7 = vector.load %arg3[%c0_3, %c0_4] : memref<128x128xf32, #tpu.memory_space<vmem>>, vector<128x128xf32>
    tpu.vector_store %arg3[%c0_3, %c0_4], %6 {strides = array<i32>} : memref<128x128xf32, #tpu.memory_space<vmem>>, vector<128x128xf32>,
    return
  }
  func.func @transform_0(%arg0: i32) -> (i32, i32) {
    %c0_i32 = arith.constant 0 : i32
    %c0_i32_0 = arith.constant 0 : i32
    return %arg0, %c0_i32 : i32, i32
  }
  func.func @transform_1(%arg0: i32) -> (i32, i32) {
    %c0_i32 = arith.constant 0 : i32
    %c0_i32_0 = arith.constant 0 : i32
    return %arg0, %c0_i32 : i32, i32
  }
  func.func @transform_2(%arg0: i32) -> (i32, i32) {
    %c0_i32 = arith.constant 0 : i32
    %c0_i32_0 = arith.constant 0 : i32
    return %arg0, %c0_i32 : i32, i32
  }
}

</mosaic_0001>

<llo_original>
// kernel: tpu_custom_call.1
$region0: #{tpu_custom_call.1}
  #allocation0 [shape = 'u32[]', space=smem, size = 0x4, offset = 0x4, fixed_abs, tag = 'smem constant byte address 0x4 - core index']
  #allocation1 [shape = 'u32[144,128]{1,0:T(1,128)}', space=vmem, size = 0x12000, scoped, tag = 'internal scratch']
  %s0 = inlined_call_operand.vmem [shape: f32[512,128], index: 0, kind: input, shape index: {}]
  %s1 = inlined_call_operand.vmem [shape: f32[512,1], index: 1, kind: input, shape index: {}]
  %s2 = inlined_call_operand.hbm [shape: f32[512,128], index: 2, kind: output, shape index: {}]
  %s3 = sld [smem:[#allocation0]]
  $region41: #{tpu_custom_call.1} parent=0
    _
  %s5 = ssub.s32 1, %s3
  %s6 = scalar_select 0, %s5, %s3
  $region1: #{tpu_custom_call.1} parent=0
    #allocation2 [shape = 'u8[131072]{0}', space=vmem, size = 0x20000, scoped, tag = 'output window, operand 0']
    #allocation3 [shape = 's32[2]{0}', space=sflag, size = 0x8, scoped, tag = 'scoped memory for tpu_custom_call.1']
    %7 = vsyncpa [#allocation3], 0
    %s8 = scalar_lea.sflag [#allocation3], 1
    %9 = vsyncpa %s8, 0
    loop: start=0, step=1, limit=6
    $region2: #{tpu_custom_call.1} parent=1 // loop_pre_header
      _
    $region3: #{tpu_custom_call.1} parent=1 // loop_header
      %s11 = sphi 0, %s15
      %p12 = scmp.ge.s32.totalorder %s11, 6
      %s21 = sphi 0, %s23
      %s24 = sphi 0, %s21
      %s25 = sphi 0, %s24
      %s41 = sphi 0, %s25
      %s47 = sphi 0, %s49
      %s50 = sphi 0, %s47
      %s51 = sphi 0, %s50
      %s67 = sphi 0, %s51
      %s73 = sphi 0, %s75
      %s76 = sphi 0, %s73
      %s77 = sphi 0, %s76
      %s93 = sphi 0, %s77
    $region4: #{tpu_custom_call.1} parent=1 // loop_header_branch
      %14 = sbr.rel (%p12) target = $region8
    $region5: #{tpu_custom_call.1} parent=1 // loop_body
      %s16 = ssub.s32 %s11, 1
      %s17 = ssub.s32 %s11, 2
      %s18 = sadd.s32 %s11, 1
      %s19 = ssub.s32 %s11, %s18
      %p20 = scmp.eq.s32.totalorder %s19, 0
      %s22 = sadd.s32 %s21, 1
      %s23 = scalar_select %p20, %s21, %s22
      %p26 = pneg %p20
      %p27 = scmp.eq.s32.totalorder %s11, 3
      %p28 = por %p26, %p27
      %p29 = scmp.ne.s32.totalorder %s21, %s24
      %p30 = scmp.eq.s32.totalorder %s11, 0
      %p31 = por %p29, %p30
      %p32 = scmp.ne.s32.totalorder %s21, %s24
      %p33 = scmp.eq.s32.totalorder %s16, 3
      %p34 = por %p32, %p33
      %p35 = scmp.ne.s32.totalorder %s24, %s25
      %p36 = scmp.eq.s32.totalorder %s16, 0
      %p37 = por %p35, %p36
      %p38 = scmp.ne.s32.totalorder %s24, %s25
      %p39 = scmp.eq.s32.totalorder %s17, 3
      %p40 = por %p38, %p39
      %p42 = scmp.ne.s32.totalorder %s25, %s41
      %p43 = scmp.eq.s32.totalorder %s17, 0
      %p44 = por %p42, %p43
      %s45 = ssub.s32 %s11, %s18
      %p46 = scmp.eq.s32.totalorder %s45, 0
      %s48 = sadd.s32 %s47, 1
      %s49 = scalar_select %p46, %s47, %s48
      %p52 = pneg %p46
      %p53 = scmp.eq.s32.totalorder %s11, 3
      %p54 = por %p52, %p53
      %p55 = scmp.ne.s32.totalorder %s47, %s50
      %p56 = scmp.eq.s32.totalorder %s11, 0
      %p57 = por %p55, %p56
      %p58 = scmp.ne.s32.totalorder %s47, %s50
      %p59 = scmp.eq.s32.totalorder %s16, 3
      %p60 = por %p58, %p59
      %p61 = scmp.ne.s32.totalorder %s50, %s51
      %p62 = scmp.eq.s32.totalorder %s16, 0
      %p63 = por %p61, %p62
      %p64 = scmp.ne.s32.totalorder %s50, %s51
      %p65 = scmp.eq.s32.totalorder %s17, 3
      %p66 = por %p64, %p65
      %p68 = scmp.ne.s32.totalorder %s51, %s67
      %p69 = scmp.eq.s32.totalorder %s17, 0
      %p70 = por %p68, %p69
      %s71 = ssub.s32 %s11, %s18
      %p72 = scmp.eq.s32.totalorder %s71, 0
      %s74 = sadd.s32 %s73, 1
      %s75 = scalar_select %p72, %s73, %s74
      %p78 = pneg %p72
      %p79 = scmp.eq.s32.totalorder %s11, 3
      %p80 = por %p78, %p79
      %p81 = scmp.ne.s32.totalorder %s73, %s76
      %p82 = scmp.eq.s32.totalorder %s11, 0
      %p83 = por %p81, %p82
      %p84 = scmp.ne.s32.totalorder %s73, %s76
      %p85 = scmp.eq.s32.totalorder %s16, 3
      %p86 = por %p84, %p85
      %p87 = scmp.ne.s32.totalorder %s76, %s77
      %p88 = scmp.eq.s32.totalorder %s16, 0
      %p89 = por %p87, %p88
      %p90 = scmp.ne.s32.totalorder %s76, %s77
      %p91 = scmp.eq.s32.totalorder %s17, 3
      %p92 = por %p90, %p91
      %p94 = scmp.ne.s32.totalorder %s77, %s93
      %p95 = scmp.eq.s32.totalorder %s17, 0
      %p96 = por %p94, %p95
      %p97 = scmp.le.s32.totalorder 1, %s11
      %p98 = scmp.lt.s32.totalorder %s11, 5
      %p99 = pnand %p97, %p98
      %p100 = pneg %p99
      // Predicated region
      $region9: #{tpu_custom_call.1} parent=5 // pred_check
        _
      $region10: #{tpu_custom_call.1} parent=5 // pred_check_branch
        %102 = sbr.rel (%p99) target = $region12
      $region11: #{tpu_custom_call.1} parent=5 // pred_region
        %s103 = ssub.s32 %s11, 1
      $region12: #{tpu_custom_call.1} parent=5 // pred_fallthru
        _
      %p104 = scmp.lt.s32.totalorder %s11, 4
      // Predicated region
      $region13: #{tpu_custom_call.1} parent=5 // pred_check
        %p105 = pneg %p104
      $region14: #{tpu_custom_call.1} parent=5 // pred_check_branch
        %107 = sbr.rel (%p105) target = $region16
      $region15: #{tpu_custom_call.1} parent=5 // pred_region
        // Predicated region
        $region17: #{tpu_custom_call.1} parent=15 // pred_check
          %p108 = pneg %p31
        $region18: #{tpu_custom_call.1} parent=15 // pred_check_branch
          %110 = sbr.rel (%p108) target = $region20
        $region19: #{tpu_custom_call.1} parent=15 // pred_region
          %s111 = smul.u32 16, %s11
          %p112 = scmp.lt.s32.totalorder %s111, 63
          %s113 = scalar_select %p112, %s111, 63
          %s114 = smul.addr %s113, 8
          %s115 = scalar_lea.vmem %s0, %s114
          %s116 = smul.u32 16, %s11
        $region20: #{tpu_custom_call.1} parent=15 // pred_fallthru
          _
        // Predicated region
        $region21: #{tpu_custom_call.1} parent=15 // pred_check
          %p117 = pneg %p57
        $region22: #{tpu_custom_call.1} parent=15 // pred_check_branch
          %119 = sbr.rel (%p117) target = $region24
        $region23: #{tpu_custom_call.1} parent=15 // pred_region
          %s120 = smul.u32 16, %s11
          %p121 = scmp.lt.s32.totalorder %s120, 63
          %s122 = scalar_select %p121, %s120, 63
          %s123 = smul.addr %s122, 8
          %s124 = scalar_lea.vmem %s1, %s123
          %s125 = smul.u32 16, %s11
        $region24: #{tpu_custom_call.1} parent=15 // pred_fallthru
          _
      $region16: #{tpu_custom_call.1} parent=5 // pred_fallthru
        _
      %p126 = scmp.le.s32.totalorder 1, %s11
      %p127 = scmp.lt.s32.totalorder %s11, 5
      %p128 = pnand %p126, %p127
      %p129 = pneg %p128
      // Predicated region
      $region25: #{tpu_custom_call.1} parent=5 // pred_check
        _
      $region26: #{tpu_custom_call.1} parent=5 // pred_check_branch
        %131 = sbr.rel (%p128) target = $region28
      $region27: #{tpu_custom_call.1} parent=5 // pred_region
        %s132 = ssub.s32 %s11, 1
        %s133 = smul.u32 16, %s16
        %p134 = scmp.lt.s32.totalorder %s133, 63
        %s135 = scalar_select %p134, %s133, 63
        %s136 = smul.addr %s135, 8
        %s137 = scalar_lea.vmem %s0, %s136
        %p138 = pneg %p37
        %p139 = pneg %p34
        %s140 = smul.u32 16, %s16
        %p141 = scmp.lt.s32.totalorder %s140, 63
        %s142 = scalar_select %p141, %s140, 63
        %s143 = smul.addr %s142, 8
        %s144 = scalar_lea.vmem %s1, %s143
        %p145 = pneg %p63
        %p146 = pneg %p60
        %p147 = pneg %p89
        %p148 = pneg %p86
        %s149 = sand.u32 %s76, 1
        %s150 = scalar_lea.sflag [#allocation3], %s149
        %s151 = sand.u32 %s76, 1
        %s152 = smul.addr %s151, 128
        %s153 = scalar_lea.vmem [#allocation2], %s152
        %s154 = smul.u32 16, %s16
        %p155 = scmp.lt.s32.totalorder %s154, 63
        %s156 = scalar_select %p155, %s154, 63
        %s157 = smul.addr %s156, 8
        %s158 = scalar_lea.vmem %s0, %s157
        %s159 = smul.u32 16, %s16
        %s160 = smul.u32 16, %s16
        %p161 = scmp.lt.s32.totalorder %s160, 63
        %s162 = scalar_select %p161, %s160, 63
        %s163 = smul.addr %s162, 8
        %s164 = scalar_lea.vmem %s1, %s163
        %s165 = smul.u32 16, %s16
        %s166 = smul.u32 16, %s16
        %v167 = vld [vmem:[%s164] sm:$0xff]
        %v168 = vld [vmem:[%s164 + $0x8] sm:$0xff]
        %v169 = vld [vmem:[%s164 + $0x10] sm:$0xff]
        %v170 = vld [vmem:[%s164 + $0x18] sm:$0xff]
        %v171 = vld [vmem:[%s164 + $0x20] sm:$0xff]
        %v172 = vld [vmem:[%s164 + $0x28] sm:$0xff]
        %v173 = vld [vmem:[%s164 + $0x30] sm:$0xff]
        %v174 = vld [vmem:[%s164 + $0x38] sm:$0xff]
        %v175 = vld [vmem:[%s164 + $0x40] sm:$0xff]
        %v176 = vld [vmem:[%s164 + $0x48] sm:$0xff]
        %v177 = vld [vmem:[%s164 + $0x50] sm:$0xff]
        %v178 = vld [vmem:[%s164 + $0x58] sm:$0xff]
        %v179 = vld [vmem:[%s164 + $0x60] sm:$0xff]
        %v180 = vld [vmem:[%s164 + $0x68] sm:$0xff]
        %v181 = vld [vmem:[%s164 + $0x70] sm:$0xff]
        %v182 = vld [vmem:[%s164 + $0x78] sm:$0xff]
        %v183 = vmul.f32 %v167, -0.0
        %v184 = vmul.f32 %v168, -0.0
        %v185 = vmul.f32 %v169, -0.0
        %v186 = vmul.f32 %v170, -0.0
        %v187 = vmul.f32 %v171, -0.0
        %v188 = vmul.f32 %v172, -0.0
        %v189 = vmul.f32 %v173, -0.0
        %v190 = vmul.f32 %v174, -0.0
        %v191 = vmul.f32 %v175, -0.0
        %v192 = vmul.f32 %v176, -0.0
        %v193 = vmul.f32 %v177, -0.0
        %v194 = vmul.f32 %v178, -0.0
        %v195 = vmul.f32 %v179, -0.0
        %v196 = vmul.f32 %v180, -0.0
        %v197 = vmul.f32 %v181, -0.0
        %v198 = vmul.f32 %v182, -0.0
        %v199 = vmul.f32 %v183, 1.442695
        %v200 = vpow.pop %v199
        %v201 = vmul.f32 %v184, 1.442695
        %v202 = vpow.pop %v201
        %v203 = vmul.f32 %v185, 1.442695
        %v204 = vpow.pop %v203
        %v205 = vmul.f32 %v186, 1.442695
        %v206 = vpow.pop %v205
        %v207 = vmul.f32 %v187, 1.442695
        %v208 = vpow.pop %v207
        %v209 = vmul.f32 %v188, 1.442695
        %v210 = vpow.pop %v209
        %v211 = vmul.f32 %v189, 1.442695
        %v212 = vpow.pop %v211
        %v213 = vmul.f32 %v190, 1.442695
        %v214 = vpow.pop %v213
        %v215 = vmul.f32 %v191, 1.442695
        %v216 = vpow.pop %v215
        %v217 = vmul.f32 %v192, 1.442695
        %v218 = vpow.pop %v217
        %v219 = vmul.f32 %v193, 1.442695
        %v220 = vpow.pop %v219
        %v221 = vmul.f32 %v194, 1.442695
        %v222 = vpow.pop %v221
        %v223 = vmul.f32 %v195, 1.442695
        %v224 = vpow.pop %v223
        %v225 = vmul.f32 %v196, 1.442695
        %v226 = vpow.pop %v225
        %v227 = vmul.f32 %v197, 1.442695
        %v228 = vpow.pop %v227
        %v229 = vmul.f32 %v198, 1.442695
        %v230 = vpow.pop %v229
        %v231 = vld [vmem:[%s158] sm:$0xff]
        %v232 = vld [vmem:[%s158 + $0x8] sm:$0xff]
        %v233 = vld [vmem:[%s158 + $0x10] sm:$0xff]
        %v234 = vld [vmem:[%s158 + $0x18] sm:$0xff]
        %v235 = vld [vmem:[%s158 + $0x20] sm:$0xff]
        %v236 = vld [vmem:[%s158 + $0x28] sm:$0xff]
        %v237 = vld [vmem:[%s158 + $0x30] sm:$0xff]
        %v238 = vld [vmem:[%s158 + $0x38] sm:$0xff]
        %v239 = vld [vmem:[%s158 + $0x40] sm:$0xff]
        %v240 = vld [vmem:[%s158 + $0x48] sm:$0xff]
        %v241 = vld [vmem:[%s158 + $0x50] sm:$0xff]
        %v242 = vld [vmem:[%s158 + $0x58] sm:$0xff]
        %v243 = vld [vmem:[%s158 + $0x60] sm:$0xff]
        %v244 = vld [vmem:[%s158 + $0x68] sm:$0xff]
        %v245 = vld [vmem:[%s158 + $0x70] sm:$0xff]
        %v246 = vld [vmem:[%s158 + $0x78] sm:$0xff]
        %248 = vset.pattern.permute.xlu0 0
        %249 = vperm.xlu0 %248, %v200
        %v250 = vpop.permute.xlu0 %249
        %253 = vset.pattern.permute.xlu0 0
        %254 = vperm.xlu0 %253, %v202
        %v255 = vpop.permute.xlu0 %254
        %258 = vset.pattern.permute.xlu0 0
        %259 = vperm.xlu0 %258, %v204
        %v260 = vpop.permute.xlu0 %259
        %263 = vset.pattern.permute.xlu0 0
        %264 = vperm.xlu0 %263, %v206
        %v265 = vpop.permute.xlu0 %264
        %268 = vset.pattern.permute.xlu0 0
        %269 = vperm.xlu0 %268, %v208
        %v270 = vpop.permute.xlu0 %269
        %273 = vset.pattern.permute.xlu0 0
        %274 = vperm.xlu0 %273, %v210
        %v275 = vpop.permute.xlu0 %274
        %278 = vset.pattern.permute.xlu0 0
        %279 = vperm.xlu0 %278, %v212
        %v280 = vpop.permute.xlu0 %279
        %283 = vset.pattern.permute.xlu0 0
        %284 = vperm.xlu0 %283, %v214
        %v285 = vpop.permute.xlu0 %284
        %288 = vset.pattern.permute.xlu0 0
        %289 = vperm.xlu0 %288, %v216
        %v290 = vpop.permute.xlu0 %289
        %293 = vset.pattern.permute.xlu0 0
        %294 = vperm.xlu0 %293, %v218
        %v295 = vpop.permute.xlu0 %294
        %298 = vset.pattern.permute.xlu0 0
        %299 = vperm.xlu0 %298, %v220
        %v300 = vpop.permute.xlu0 %299
        %303 = vset.pattern.permute.xlu0 0
        %304 = vperm.xlu0 %303, %v222
        %v305 = vpop.permute.xlu0 %304
        %308 = vset.pattern.permute.xlu0 0
        %309 = vperm.xlu0 %308, %v224
        %v310 = vpop.permute.xlu0 %309
        %313 = vset.pattern.permute.xlu0 0
        %314 = vperm.xlu0 %313, %v226
        %v315 = vpop.permute.xlu0 %314
        %318 = vset.pattern.permute.xlu0 0
        %319 = vperm.xlu0 %318, %v228
        %v320 = vpop.permute.xlu0 %319
        %323 = vset.pattern.permute.xlu0 0
        %324 = vperm.xlu0 %323, %v230
        %v325 = vpop.permute.xlu0 %324
        %v327 = vmul.f32 %v231, %v250
        %v328 = vmul.f32 %v232, %v255
        %v329 = vmul.f32 %v233, %v260
        %v330 = vmul.f32 %v234, %v265
        %v331 = vmul.f32 %v235, %v270
        %v332 = vmul.f32 %v236, %v275
        %v333 = vmul.f32 %v237, %v280
        %v334 = vmul.f32 %v238, %v285
        %v335 = vmul.f32 %v239, %v290
        %v336 = vmul.f32 %v240, %v295
        %v337 = vmul.f32 %v241, %v300
        %v338 = vmul.f32 %v242, %v305
        %v339 = vmul.f32 %v243, %v310
        %v340 = vmul.f32 %v244, %v315
        %v341 = vmul.f32 %v245, %v320
        %v342 = vmul.f32 %v246, %v325
        %343 = vst [vmem:[%s153] sm:$0xff] %v327
        %344 = vst [vmem:[%s153 + $0x8] sm:$0xff] %v328
        %345 = vst [vmem:[%s153 + $0x10] sm:$0xff] %v329
        %346 = vst [vmem:[%s153 + $0x18] sm:$0xff] %v330
        %347 = vst [vmem:[%s153 + $0x20] sm:$0xff] %v331
        %348 = vst [vmem:[%s153 + $0x28] sm:$0xff] %v332
        %349 = vst [vmem:[%s153 + $0x30] sm:$0xff] %v333
        %350 = vst [vmem:[%s153 + $0x38] sm:$0xff] %v334
        %351 = vst [vmem:[%s153 + $0x40] sm:$0xff] %v335
        %352 = vst [vmem:[%s153 + $0x48] sm:$0xff] %v336
        %353 = vst [vmem:[%s153 + $0x50] sm:$0xff] %v337
        %354 = vst [vmem:[%s153 + $0x58] sm:$0xff] %v338
        %355 = vst [vmem:[%s153 + $0x60] sm:$0xff] %v339
        %356 = vst [vmem:[%s153 + $0x68] sm:$0xff] %v340
        %357 = vst [vmem:[%s153 + $0x70] sm:$0xff] %v341
        %358 = vst [vmem:[%s153 + $0x78] sm:$0xff] %v342
        %s359 = sand.u32 %s76, 1
        %s360 = scalar_lea.sflag [#allocation3], %s359
        %s361 = sand.u32 %s76, 1
        %s362 = smul.addr %s361, 128
        %s363 = scalar_lea.vmem [#allocation2], %s362
        // Predicated region
        $region29: #{tpu_custom_call.1} parent=27 // pred_check
          %p364 = pneg %p86
        $region30: #{tpu_custom_call.1} parent=27 // pred_check_branch
          %366 = sbr.rel (%p364) target = $region32
        $region31: #{tpu_custom_call.1} parent=27 // pred_region
          %s367 = smul.u32 16, %s16
          %s369 = ssub.s32 2048, 2048
          %370 = vsyncadd %s360, %s369
          %s371 = smul.addr %s367, 128
          %s372 = scalar_lea.hbm %s2, %s371
          %s373 = sshll.u32 %s363, 4
          %s374 = int_to_ptr.vmem [resolvable:$true] %s373
          %379 = dma.vmem_to_hbm [thread:$0]  %s374, 2048, %s372, %s360, 128, 128, 8
        $region32: #{tpu_custom_call.1} parent=27 // pred_fallthru
          _
      $region28: #{tpu_custom_call.1} parent=5 // pred_fallthru
        _
      %p380 = scmp.le.s32.totalorder 2, %s11
      // Predicated region
      $region33: #{tpu_custom_call.1} parent=5 // pred_check
        %p381 = pneg %p380
      $region34: #{tpu_custom_call.1} parent=5 // pred_check_branch
        %383 = sbr.rel (%p381) target = $region36
      $region35: #{tpu_custom_call.1} parent=5 // pred_region
        %s384 = ssub.s32 %s11, 2
        // Predicated region
        $region37: #{tpu_custom_call.1} parent=35 // pred_check
          %p385 = pneg %p92
        $region38: #{tpu_custom_call.1} parent=35 // pred_check_branch
          %387 = sbr.rel (%p385) target = $region40
        $region39: #{tpu_custom_call.1} parent=35 // pred_region
          %s388 = sand.u32 %s77, 1
          %s389 = scalar_lea.sflag [#allocation3], %s388
          %s390 = sand.u32 %s77, 1
          %s391 = smul.addr %s390, 128
          %s392 = scalar_lea.vmem [#allocation2], %s391
          %393 = dma.done %s389, 2048
        $region40: #{tpu_custom_call.1} parent=35 // pred_fallthru
          _
      $region36: #{tpu_custom_call.1} parent=5 // pred_fallthru
        _
    $region6: #{tpu_custom_call.1} parent=1 // loop_footer
      %s15 = sadd.s32 1, %s11
    $region7: #{tpu_custom_call.1} parent=1 // loop_footer_branch
      %10 = sbr.rel target = $region3
    $region8: #{tpu_custom_call.1} parent=1 // loop_exit
      _
    %394 = vsyncpa [#allocation3], 1
    %s395 = scalar_lea.sflag [#allocation3], 1
    %396 = vsyncpa %s395, 1

</llo_original>
